<compile_context>
chip_gen: v7x
topology: tpu7x:2x2x1
jax: 0.10.0
libtpu: 0.0.40
codegen_flags: <defaults>
</compile_context>

<pallas_src>
import numpy as np
import jax
import jax.numpy as jnp
from jax.experimental import pallas as pl
from jax.experimental.pallas import tpu as pltpu

NUM_PARTICLES = 64
HIDDEN_DIM = 1      # hardcoded in the module
TOTAL_EMB = 1       # hardcoded in the module
RESAMP_ALPHA = 0.3  # TODO(synk): stochastic soft-resampling (torch.multinomial) and
                    # reparameterization noise are omitted -> deterministic approximation.


def _pfrnn_kernel(w_ref, x_ref, h0_ref, y_ref, hs_ref):
    """Whole-sequence PF-RNN recurrence in a single invocation.

    w_ref : (12,) f32 SMEM   [w_zx, w_zh, b_z, w_rx, w_rh, b_r,
                              w_nx, w_nh, b_n, w_ox, w_oh, b_o]
    x_ref : (B, S)    f32 VMEM  observations (batch on sublanes, time on lanes)
    h0_ref: (B, P)    f32 VMEM  initial per-particle hidden state (particles on lanes)
    y_ref : (B, S)    f32 VMEM  particle-weighted hidden mean per step
    hs_ref: (S, B, P) f32 VMEM  per-particle hidden states per step
    """
    B, S = x_ref.shape
    P = h0_ref.shape[1]

    # Hoisted scalar->vreg broadcasts of the recurrent gate weights (done once; a fully
    # unrolled loop would otherwise re-emit the broadcast 4*S times).
    w_zh = jnp.full((B, P), w_ref[1], dtype=jnp.float32)
    w_rh = jnp.full((B, P), w_ref[4], dtype=jnp.float32)
    w_nh = jnp.full((B, P), w_ref[7], dtype=jnp.float32)
    w_oh = jnp.full((B, P), w_ref[10], dtype=jnp.float32)

    # Precompute all x-dependent affine terms on the (B, S) block in one shot.
    x = x_ref[...]
    xz = w_ref[0] * x + w_ref[2]
    xr = w_ref[3] * x + w_ref[5]
    xn = w_ref[6] * x + w_ref[8]
    xo = w_ref[9] * x + w_ref[11]

    h = h0_ref[...]                                        # (B, P) live carry
    # Log particle-weight carry, kept only max-normalized: softmax is shift invariant,
    # so the uniform init log(1/P) (a per-row constant) is dropped as well.
    logp = jnp.zeros((B, P), dtype=jnp.float32)

    # Register accumulator for the per-step weighted means -> one lane-dense store later.
    lane = jax.lax.broadcasted_iota(jnp.int32, (B, S), 1)
    y_acc = jnp.zeros((B, S), dtype=jnp.float32)

    # S is small and static -> fully unrolled; carries stay in vregs, all slices static.
    for s in range(S):
        # GRU-style particle update (deterministic; no reparameterization noise).
        z = jax.nn.sigmoid(xz[:, s:s + 1] + w_zh * h)
        r = jax.nn.sigmoid(xr[:, s:s + 1] + w_rh * h)
        n = jnp.tanh(xn[:, s:s + 1] + w_nh * (r * h))
        h = n + z * (h - n)

        # Observation log-likelihood -> particle re-weighting (softmax over particles).
        logw = xo[:, s:s + 1] + w_oh * h + logp
        m = jnp.max(logw, axis=-1, keepdims=True)          # (B, 1)
        t = logw - m
        e = jnp.exp(t)                                     # unnormalized weights
        logp = t                                           # max-normalized log-weight carry

        # Fused lane reduction: stack e and h*e on the (mostly idle) sublane axis and
        # reduce once, then split into denominator and weighted-sum numerator.
        red = jnp.sum(jnp.concatenate([e, h * e], axis=0), axis=-1, keepdims=True)  # (2B,1)
        ssum = red[0:B]                                    # (B, 1)
        num = red[B:2 * B]                                 # (B, 1)
        y_col = num / ssum                                 # exact division on (B,1)

        # Accumulate y in registers; store once after the loop.
        y_acc = jnp.where(lane == s, y_col, y_acc)

        hs_ref[s] = h

    y_ref[...] = y_acc                                     # single lane-dense store


@jax.jit
def harvey_svpf_forward(observations, weights, h0):
    """observations: (B, S, 1) f32; weights: (12,) f32; h0: (P, B) f32.

    Returns (y_out, pf_out) matching the PyTorch module:
      y_out : (S, B, 1)   -- particle-weighted hidden states
      pf_out: (S, P*B, 1) -- all particle hidden states (dropout p=0 => identity)
    """
    B, S, E = observations.shape
    assert E == TOTAL_EMB
    P = h0.shape[0]
    assert h0.shape == (P, B)

    x = observations[..., 0].astype(jnp.float32)           # (B, S)
    h0_bp = jnp.transpose(h0).astype(jnp.float32)          # (B, P): particles on lanes

    y_bs, hs = pl.pallas_call(
        _pfrnn_kernel,
        out_shape=(
            jax.ShapeDtypeStruct((B, S), jnp.float32),
            jax.ShapeDtypeStruct((S, B, P), jnp.float32),
        ),
        in_specs=[
            pl.BlockSpec(memory_space=pltpu.MemorySpace.SMEM),   # 12 scalar weights
            pl.BlockSpec(memory_space=pltpu.MemorySpace.VMEM),   # x (B, S)
            pl.BlockSpec(memory_space=pltpu.MemorySpace.VMEM),   # h0 (B, P)
        ],
        out_specs=(
            pl.BlockSpec(memory_space=pltpu.MemorySpace.VMEM),   # y (B, S)
            pl.BlockSpec(memory_space=pltpu.MemorySpace.VMEM),   # hs (S, B, P)
        ),
    )(weights, x, h0_bp)

    y_out = jnp.transpose(y_bs)[:, :, None]                      # (S, B, 1)
    # Particle-major p*B+b ordering, matching embedding.repeat(P,1,1) + view([S,P,-1,H]).
    pf_out = jnp.transpose(hs, (0, 2, 1)).reshape(S, P * B, 1)   # (S, P*B, 1)
    return y_out, pf_out


def _reference_forward(observations, weights, h0, num_particles=NUM_PARTICLES):
    """Pure-JAX reference of the same recurrence (for correctness check)."""
    B, S, _ = observations.shape
    P = num_particles
    w = weights
    x = jnp.transpose(observations[..., 0])                      # (S, B)
    h = h0                                                       # (P, B)
    p = jnp.full((P, B), 1.0 / P, dtype=jnp.float32)
    ys, hss = [], []
    for s in range(S):
        xs = x[s][None, :]
        z = jax.nn.sigmoid(w[0] * xs + w[1] * h + w[2])
        r = jax.nn.sigmoid(w[3] * xs + w[4] * h + w[5])
        n = jnp.tanh(w[6] * xs + w[7] * (r * h) + w[8])
        h = (1.0 - z) * n + z * h
        logw = w[9] * xs + w[10] * h + w[11] + jnp.log(p)
        p = jax.nn.softmax(logw, axis=0)
        hss.append(h)
        ys.append(jnp.sum(h * p, axis=0))
    y = jnp.stack(ys)[..., None]                                 # (S, B, 1)
    pf = jnp.stack(hss).reshape(S, P * B, 1)                     # particle-major
    return y, pf


if __name__ == "__main__":
    B, S = 2, 8
    P = NUM_PARTICLES

    key = jax.random.PRNGKey(0)
    k_obs, k_h0, k_w = jax.random.split(key, 3)

    observations = jax.random.normal(k_obs, (B, S, TOTAL_EMB), dtype=jnp.float32)
    # init_hidden: h0 = rand(B*P, H) * 4 - 2  (particle-major layout -> (P, B) here)
    h0 = jax.random.uniform(k_h0, (P, B), dtype=jnp.float32) * 4.0 - 2.0
    # Deterministic PF-RNN cell weights (PFRNN class not provided in the source).
    weights = 0.5 * jax.random.normal(k_w, (12,), dtype=jnp.float32)

    y_out, pf_out = harvey_svpf_forward(observations, weights, h0)
    jax.block_until_ready((y_out, pf_out))

    y_ref, pf_ref = _reference_forward(observations, weights, h0, P)
    # Per-particle hidden states: same math modulo op ordering -> tight tolerance.
    np.testing.assert_allclose(np.asarray(pf_out), np.asarray(pf_ref), rtol=2e-3, atol=2e-3)
    # Weighted mean now uses exact division on the (B,1) denominator.
    np.testing.assert_allclose(np.asarray(y_out), np.asarray(y_ref), rtol=5e-3, atol=2e-3)

    assert y_out.shape == (S, B, 1)
    assert pf_out.shape == (S, P * B, 1)
    print("KERNEL_OK")
</pallas_src>

<mosaic_0001>
module attributes {stable_mosaic.version = 11 : i64} {
  func.func @_pfrnn_kernel(%arg0: memref<12xf32, #tpu.memory_space<smem>>, %arg1: memref<2x8xf32, #tpu.memory_space<vmem>>, %arg2: memref<2x64xf32, #tpu.memory_space<vmem>>, %arg3: memref<2x8xf32, #tpu.memory_space<vmem>>, %arg4: memref<8x2x64xf32, #tpu.memory_space<vmem>>) attributes {dimension_semantics = [], scalar_prefetch = 0 : i64, scratch_operands = 0 : i64, tpu.core_type = #tpu.core_type<tc>} {
    %c1 = arith.constant 1 : index
    %0 = memref.load %arg0[%c1] : memref<12xf32, #tpu.memory_space<smem>>
    %1 = vector.broadcast %0 : f32 to vector<2x64xf32>
    %c4 = arith.constant 4 : index
    %2 = memref.load %arg0[%c4] : memref<12xf32, #tpu.memory_space<smem>>
    %3 = vector.broadcast %2 : f32 to vector<2x64xf32>
    %c7 = arith.constant 7 : index
    %4 = memref.load %arg0[%c7] : memref<12xf32, #tpu.memory_space<smem>>
    %5 = vector.broadcast %4 : f32 to vector<2x64xf32>
    %c10 = arith.constant 10 : index
    %6 = memref.load %arg0[%c10] : memref<12xf32, #tpu.memory_space<smem>>
    %7 = vector.broadcast %6 : f32 to vector<2x64xf32>
    %c0 = arith.constant 0 : index
    %c0_0 = arith.constant 0 : index
    %8 = vector.load %arg1[%c0, %c0_0] : memref<2x8xf32, #tpu.memory_space<vmem>>, vector<2x8xf32>
    %c0_1 = arith.constant 0 : index
    %9 = memref.load %arg0[%c0_1] : memref<12xf32, #tpu.memory_space<smem>>
    %10 = vector.broadcast %9 : f32 to vector<2x8xf32>
    %11 = arith.mulf %10, %8 : vector<2x8xf32>
    %c2 = arith.constant 2 : index
    %12 = memref.load %arg0[%c2] : memref<12xf32, #tpu.memory_space<smem>>
    %13 = vector.broadcast %12 : f32 to vector<2x8xf32>
    %14 = arith.addf %11, %13 : vector<2x8xf32>
    %c3 = arith.constant 3 : index
    %15 = memref.load %arg0[%c3] : memref<12xf32, #tpu.memory_space<smem>>
    %16 = vector.broadcast %15 : f32 to vector<2x8xf32>
    %17 = arith.mulf %16, %8 : vector<2x8xf32>
    %c5 = arith.constant 5 : index
    %18 = memref.load %arg0[%c5] : memref<12xf32, #tpu.memory_space<smem>>
    %19 = vector.broadcast %18 : f32 to vector<2x8xf32>
    %20 = arith.addf %17, %19 : vector<2x8xf32>
    %c6 = arith.constant 6 : index
    %21 = memref.load %arg0[%c6] : memref<12xf32, #tpu.memory_space<smem>>
    %22 = vector.broadcast %21 : f32 to vector<2x8xf32>
    %23 = arith.mulf %22, %8 : vector<2x8xf32>
    %c8 = arith.constant 8 : index
    %24 = memref.load %arg0[%c8] : memref<12xf32, #tpu.memory_space<smem>>
    %25 = vector.broadcast %24 : f32 to vector<2x8xf32>
    %26 = arith.addf %23, %25 : vector<2x8xf32>
    %c9 = arith.constant 9 : index
    %27 = memref.load %arg0[%c9] : memref<12xf32, #tpu.memory_space<smem>>
    %28 = vector.broadcast %27 : f32 to vector<2x8xf32>
    %29 = arith.mulf %28, %8 : vector<2x8xf32>
    %c11 = arith.constant 11 : index
    %30 = memref.load %arg0[%c11] : memref<12xf32, #tpu.memory_space<smem>>
    %31 = vector.broadcast %30 : f32 to vector<2x8xf32>
    %32 = arith.addf %29, %31 : vector<2x8xf32>
    %c0_2 = arith.constant 0 : index
    %c0_3 = arith.constant 0 : index
    %33 = vector.load %arg2[%c0_2, %c0_3] : memref<2x64xf32, #tpu.memory_space<vmem>>, vector<2x64xf32>
    %cst = arith.constant 0.000000e+00 : f32
    %34 = vector.broadcast %cst : f32 to vector<2x64xf32>
    %35 = tpu.iota {dimensions = array<i32: 1>} : vector<2x8xi32>
    %cst_4 = arith.constant 0.000000e+00 : f32
    %36 = vector.broadcast %cst_4 : f32 to vector<2x8xf32>
    %37 = vector.extract_strided_slice %14 {offsets = [0, 0], sizes = [2, 1], strides = [1, 1]} : vector<2x8xf32> to vector<2x1xf32>
    %38 = arith.mulf %1, %33 : vector<2x64xf32>
    %39 = vector.broadcast %37 : vector<2x1xf32> to vector<2x64xf32>
    %40 = arith.addf %39, %38 : vector<2x64xf32>
    %41 = arith.negf %40 : vector<2x64xf32>
    %42 = math.exp %41 : vector<2x64xf32>
    %cst_5 = arith.constant 1.000000e+00 : f32
    %43 = vector.broadcast %cst_5 : f32 to vector<2x64xf32>
    %44 = arith.addf %43, %42 : vector<2x64xf32>
    %45 = arith.divf %43, %44 : vector<2x64xf32>
    %46 = vector.extract_strided_slice %20 {offsets = [0, 0], sizes = [2, 1], strides = [1, 1]} : vector<2x8xf32> to vector<2x1xf32>
    %47 = arith.mulf %3, %33 : vector<2x64xf32>
    %48 = vector.broadcast %46 : vector<2x1xf32> to vector<2x64xf32>
    %49 = arith.addf %48, %47 : vector<2x64xf32>
    %50 = arith.negf %49 : vector<2x64xf32>
    %51 = math.exp %50 : vector<2x64xf32>
    %cst_6 = arith.constant 1.000000e+00 : f32
    %52 = vector.broadcast %cst_6 : f32 to vector<2x64xf32>
    %53 = arith.addf %52, %51 : vector<2x64xf32>
    %54 = arith.divf %52, %53 : vector<2x64xf32>
    %55 = vector.extract_strided_slice %26 {offsets = [0, 0], sizes = [2, 1], strides = [1, 1]} : vector<2x8xf32> to vector<2x1xf32>
    %56 = arith.mulf %54, %33 : vector<2x64xf32>
    %57 = arith.mulf %5, %56 : vector<2x64xf32>
    %58 = vector.broadcast %55 : vector<2x1xf32> to vector<2x64xf32>
    %59 = arith.addf %58, %57 : vector<2x64xf32>
    %60 = math.tanh %59 : vector<2x64xf32>
    %61 = arith.subf %33, %60 : vector<2x64xf32>
    %62 = arith.mulf %45, %61 : vector<2x64xf32>
    %63 = arith.addf %60, %62 : vector<2x64xf32>
    %64 = vector.extract_strided_slice %32 {offsets = [0, 0], sizes = [2, 1], strides = [1, 1]} : vector<2x8xf32> to vector<2x1xf32>
    %65 = arith.mulf %7, %63 : vector<2x64xf32>
    %66 = vector.broadcast %64 : vector<2x1xf32> to vector<2x64xf32>
    %67 = arith.addf %66, %65 : vector<2x64xf32>
    %68 = arith.addf %67, %34 : vector<2x64xf32>
    %cst_7 = arith.constant dense<0xFF800000> : vector<2xf32>
    %69 = vector.multi_reduction <maximumf>, %68, %cst_7 [1] : vector<2x64xf32> to vector<2xf32>
    %70 = vector.shape_cast %69 : vector<2xf32> to vector<2x1xf32>
    %71 = vector.broadcast %70 : vector<2x1xf32> to vector<2x64xf32>
    %72 = arith.subf %68, %71 : vector<2x64xf32>
    %73 = math.exp %72 : vector<2x64xf32>
    %74 = arith.mulf %63, %73 : vector<2x64xf32>
    %75 = tpu.concatenate %73, %74 in 0 : vector<2x64xf32>, vector<2x64xf32> -> vector<4x64xf32>
    %cst_8 = arith.constant dense<0.000000e+00> : vector<4xf32>
    %76 = vector.multi_reduction <add>, %75, %cst_8 [1] : vector<4x64xf32> to vector<4xf32>
    %77 = vector.shape_cast %76 : vector<4xf32> to vector<4x1xf32>
    %78 = vector.extract_strided_slice %77 {offsets = [0, 0], sizes = [2, 1], strides = [1, 1]} : vector<4x1xf32> to vector<2x1xf32>
    %79 = vector.extract_strided_slice %77 {offsets = [2, 0], sizes = [2, 1], strides = [1, 1]} : vector<4x1xf32> to vector<2x1xf32>
    %80 = arith.divf %79, %78 : vector<2x1xf32>
    %c0_i32 = arith.constant 0 : i32
    %81 = vector.broadcast %c0_i32 : i32 to vector<2x8xi32>
    %82 = arith.cmpi eq, %35, %81 : vector<2x8xi32>
    %83 = vector.shape_cast %80 : vector<2x1xf32> to vector<2x1xf32>
    %84 = vector.broadcast %83 : vector<2x1xf32> to vector<2x8xf32>
    %85 = arith.select %82, %84, %36 : vector<2x8xi1>, vector<2x8xf32>
    %c0_9 = arith.constant 0 : index
    %c0_10 = arith.constant 0 : index
    %c0_11 = arith.constant 0 : index
    %86 = vector.load %arg4[%c0_9, %c0_10, %c0_11] : memref<8x2x64xf32, #tpu.memory_space<vmem>>, vector<1x2x64xf32>
    %87 = vector.shape_cast %86 : vector<1x2x64xf32> to vector<2x64xf32>
    %88 = vector.shape_cast %63 : vector<2x64xf32> to vector<1x2x64xf32>
    tpu.vector_store %arg4[%c0_9, %c0_10, %c0_11], %88 {strides = array<i32>} : memref<8x2x64xf32, #tpu.memory_space<vmem>>, vector<1x2x64xf32>,
    %89 = vector.extract_strided_slice %14 {offsets = [0, 1], sizes = [2, 1], strides = [1, 1]} : vector<2x8xf32> to vector<2x1xf32>
    %90 = arith.mulf %1, %63 : vector<2x64xf32>
    %91 = vector.broadcast %89 : vector<2x1xf32> to vector<2x64xf32>
    %92 = arith.addf %91, %90 : vector<2x64xf32>
    %93 = arith.negf %92 : vector<2x64xf32>
    %94 = math.exp %93 : vector<2x64xf32>
    %cst_12 = arith.constant 1.000000e+00 : f32
    %95 = vector.broadcast %cst_12 : f32 to vector<2x64xf32>
    %96 = arith.addf %95, %94 : vector<2x64xf32>
    %97 = arith.divf %95, %96 : vector<2x64xf32>
    %98 = vector.extract_strided_slice %20 {offsets = [0, 1], sizes = [2, 1], strides = [1, 1]} : vector<2x8xf32> to vector<2x1xf32>
    %99 = arith.mulf %3, %63 : vector<2x64xf32>
    %100 = vector.broadcast %98 : vector<2x1xf32> to vector<2x64xf32>
    %101 = arith.addf %100, %99 : vector<2x64xf32>
    %102 = arith.negf %101 : vector<2x64xf32>
    %103 = math.exp %102 : vector<2x64xf32>
    %cst_13 = arith.constant 1.000000e+00 : f32
    %104 = vector.broadcast %cst_13 : f32 to vector<2x64xf32>
    %105 = arith.addf %104, %103 : vector<2x64xf32>
    %106 = arith.divf %104, %105 : vector<2x64xf32>
    %107 = vector.extract_strided_slice %26 {offsets = [0, 1], sizes = [2, 1], strides = [1, 1]} : vector<2x8xf32> to vector<2x1xf32>
    %108 = arith.mulf %106, %63 : vector<2x64xf32>
    %109 = arith.mulf %5, %108 : vector<2x64xf32>
    %110 = vector.broadcast %107 : vector<2x1xf32> to vector<2x64xf32>
    %111 = arith.addf %110, %109 : vector<2x64xf32>
    %112 = math.tanh %111 : vector<2x64xf32>
    %113 = arith.subf %63, %112 : vector<2x64xf32>
    %114 = arith.mulf %97, %113 : vector<2x64xf32>
    %115 = arith.addf %112, %114 : vector<2x64xf32>
    %116 = vector.extract_strided_slice %32 {offsets = [0, 1], sizes = [2, 1], strides = [1, 1]} : vector<2x8xf32> to vector<2x1xf32>
    %117 = arith.mulf %7, %115 : vector<2x64xf32>
    %118 = vector.broadcast %116 : vector<2x1xf32> to vector<2x64xf32>
    %119 = arith.addf %118, %117 : vector<2x64xf32>
    %120 = arith.addf %119, %72 : vector<2x64xf32>
    %cst_14 = arith.constant dense<0xFF800000> : vector<2xf32>
    %121 = vector.multi_reduction <maximumf>, %120, %cst_14 [1] : vector<2x64xf32> to vector<2xf32>
    %122 = vector.shape_cast %121 : vector<2xf32> to vector<2x1xf32>
    %123 = vector.broadcast %122 : vector<2x1xf32> to vector<2x64xf32>
    %124 = arith.subf %120, %123 : vector<2x64xf32>
    %125 = math.exp %124 : vector<2x64xf32>
    %126 = arith.mulf %115, %125 : vector<2x64xf32>
    %127 = tpu.concatenate %125, %126 in 0 : vector<2x64xf32>, vector<2x64xf32> -> vector<4x64xf32>
    %cst_15 = arith.constant dense<0.000000e+00> : vector<4xf32>
    %128 = vector.multi_reduction <add>, %127, %cst_15 [1] : vector<4x64xf32> to vector<4xf32>
    %129 = vector.shape_cast %128 : vector<4xf32> to vector<4x1xf32>
    %130 = vector.extract_strided_slice %129 {offsets = [0, 0], sizes = [2, 1], strides = [1, 1]} : vector<4x1xf32> to vector<2x1xf32>
    %131 = vector.extract_strided_slice %129 {offsets = [2, 0], sizes = [2, 1], strides = [1, 1]} : vector<4x1xf32> to vector<2x1xf32>
    %132 = arith.divf %131, %130 : vector<2x1xf32>
    %c1_i32 = arith.constant 1 : i32
    %133 = vector.broadcast %c1_i32 : i32 to vector<2x8xi32>
    %134 = arith.cmpi eq, %35, %133 : vector<2x8xi32>
    %135 = vector.shape_cast %132 : vector<2x1xf32> to vector<2x1xf32>
    %136 = vector.broadcast %135 : vector<2x1xf32> to vector<2x8xf32>
    %137 = arith.select %134, %136, %85 : vector<2x8xi1>, vector<2x8xf32>
    %c1_16 = arith.constant 1 : index
    %c0_17 = arith.constant 0 : index
    %c0_18 = arith.constant 0 : index
    %138 = vector.load %arg4[%c1_16, %c0_17, %c0_18] : memref<8x2x64xf32, #tpu.memory_space<vmem>>, vector<1x2x64xf32>
    %139 = vector.shape_cast %138 : vector<1x2x64xf32> to vector<2x64xf32>
    %140 = vector.shape_cast %115 : vector<2x64xf32> to vector<1x2x64xf32>
    tpu.vector_store %arg4[%c1_16, %c0_17, %c0_18], %140 {strides = array<i32>} : memref<8x2x64xf32, #tpu.memory_space<vmem>>, vector<1x2x64xf32>,
    %141 = vector.extract_strided_slice %14 {offsets = [0, 2], sizes = [2, 1], strides = [1, 1]} : vector<2x8xf32> to vector<2x1xf32>
    %142 = arith.mulf %1, %115 : vector<2x64xf32>
    %143 = vector.broadcast %141 : vector<2x1xf32> to vector<2x64xf32>
    %144 = arith.addf %143, %142 : vector<2x64xf32>
    %145 = arith.negf %144 : vector<2x64xf32>
    %146 = math.exp %145 : vector<2x64xf32>
    %cst_19 = arith.constant 1.000000e+00 : f32
    %147 = vector.broadcast %cst_19 : f32 to vector<2x64xf32>
    %148 = arith.addf %147, %146 : vector<2x64xf32>
    %149 = arith.divf %147, %148 : vector<2x64xf32>
    %150 = vector.extract_strided_slice %20 {offsets = [0, 2], sizes = [2, 1], strides = [1, 1]} : vector<2x8xf32> to vector<2x1xf32>
    %151 = arith.mulf %3, %115 : vector<2x64xf32>
    %152 = vector.broadcast %150 : vector<2x1xf32> to vector<2x64xf32>
    %153 = arith.addf %152, %151 : vector<2x64xf32>
    %154 = arith.negf %153 : vector<2x64xf32>
    %155 = math.exp %154 : vector<2x64xf32>
    %cst_20 = arith.constant 1.000000e+00 : f32
    %156 = vector.broadcast %cst_20 : f32 to vector<2x64xf32>
    %157 = arith.addf %156, %155 : vector<2x64xf32>
    %158 = arith.divf %156, %157 : vector<2x64xf32>
    %159 = vector.extract_strided_slice %26 {offsets = [0, 2], sizes = [2, 1], strides = [1, 1]} : vector<2x8xf32> to vector<2x1xf32>
    %160 = arith.mulf %158, %115 : vector<2x64xf32>
    %161 = arith.mulf %5, %160 : vector<2x64xf32>
    %162 = vector.broadcast %159 : vector<2x1xf32> to vector<2x64xf32>
    %163 = arith.addf %162, %161 : vector<2x64xf32>
    %164 = math.tanh %163 : vector<2x64xf32>
    %165 = arith.subf %115, %164 : vector<2x64xf32>
    %166 = arith.mulf %149, %165 : vector<2x64xf32>
    %167 = arith.addf %164, %166 : vector<2x64xf32>
    %168 = vector.extract_strided_slice %32 {offsets = [0, 2], sizes = [2, 1], strides = [1, 1]} : vector<2x8xf32> to vector<2x1xf32>
    %169 = arith.mulf %7, %167 : vector<2x64xf32>
    %170 = vector.broadcast %168 : vector<2x1xf32> to vector<2x64xf32>
    %171 = arith.addf %170, %169 : vector<2x64xf32>
    %172 = arith.addf %171, %124 : vector<2x64xf32>
    %cst_21 = arith.constant dense<0xFF800000> : vector<2xf32>
    %173 = vector.multi_reduction <maximumf>, %172, %cst_21 [1] : vector<2x64xf32> to vector<2xf32>
    %174 = vector.shape_cast %173 : vector<2xf32> to vector<2x1xf32>
    %175 = vector.broadcast %174 : vector<2x1xf32> to vector<2x64xf32>
    %176 = arith.subf %172, %175 : vector<2x64xf32>
    %177 = math.exp %176 : vector<2x64xf32>
    %178 = arith.mulf %167, %177 : vector<2x64xf32>
    %179 = tpu.concatenate %177, %178 in 0 : vector<2x64xf32>, vector<2x64xf32> -> vector<4x64xf32>
    %cst_22 = arith.constant dense<0.000000e+00> : vector<4xf32>
    %180 = vector.multi_reduction <add>, %179, %cst_22 [1] : vector<4x64xf32> to vector<4xf32>
    %181 = vector.shape_cast %180 : vector<4xf32> to vector<4x1xf32>
    %182 = vector.extract_strided_slice %181 {offsets = [0, 0], sizes = [2, 1], strides = [1, 1]} : vector<4x1xf32> to vector<2x1xf32>
    %183 = vector.extract_strided_slice %181 {offsets = [2, 0], sizes = [2, 1], strides = [1, 1]} : vector<4x1xf32> to vector<2x1xf32>
    %184 = arith.divf %183, %182 : vector<2x1xf32>
    %c2_i32 = arith.constant 2 : i32
    %185 = vector.broadcast %c2_i32 : i32 to vector<2x8xi32>
    %186 = arith.cmpi eq, %35, %185 : vector<2x8xi32>
    %187 = vector.shape_cast %184 : vector<2x1xf32> to vector<2x1xf32>
    %188 = vector.broadcast %187 : vector<2x1xf32> to vector<2x8xf32>
    %189 = arith.select %186, %188, %137 : vector<2x8xi1>, vector<2x8xf32>
    %c2_23 = arith.constant 2 : index
    %c0_24 = arith.constant 0 : index
    %c0_25 = arith.constant 0 : index
    %190 = vector.load %arg4[%c2_23, %c0_24, %c0_25] : memref<8x2x64xf32, #tpu.memory_space<vmem>>, vector<1x2x64xf32>
    %191 = vector.shape_cast %190 : vector<1x2x64xf32> to vector<2x64xf32>
    %192 = vector.shape_cast %167 : vector<2x64xf32> to vector<1x2x64xf32>
    tpu.vector_store %arg4[%c2_23, %c0_24, %c0_25], %192 {strides = array<i32>} : memref<8x2x64xf32, #tpu.memory_space<vmem>>, vector<1x2x64xf32>,
    %193 = vector.extract_strided_slice %14 {offsets = [0, 3], sizes = [2, 1], strides = [1, 1]} : vector<2x8xf32> to vector<2x1xf32>
    %194 = arith.mulf %1, %167 : vector<2x64xf32>
    %195 = vector.broadcast %193 : vector<2x1xf32> to vector<2x64xf32>
    %196 = arith.addf %195, %194 : vector<2x64xf32>
    %197 = arith.negf %196 : vector<2x64xf32>
    %198 = math.exp %197 : vector<2x64xf32>
    %cst_26 = arith.constant 1.000000e+00 : f32
    %199 = vector.broadcast %cst_26 : f32 to vector<2x64xf32>
    %200 = arith.addf %199, %198 : vector<2x64xf32>
    %201 = arith.divf %199, %200 : vector<2x64xf32>
    %202 = vector.extract_strided_slice %20 {offsets = [0, 3], sizes = [2, 1], strides = [1, 1]} : vector<2x8xf32> to vector<2x1xf32>
    %203 = arith.mulf %3, %167 : vector<2x64xf32>
    %204 = vector.broadcast %202 : vector<2x1xf32> to vector<2x64xf32>
    %205 = arith.addf %204, %203 : vector<2x64xf32>
    %206 = arith.negf %205 : vector<2x64xf32>
    %207 = math.exp %206 : vector<2x64xf32>
    %cst_27 = arith.constant 1.000000e+00 : f32
    %208 = vector.broadcast %cst_27 : f32 to vector<2x64xf32>
    %209 = arith.addf %208, %207 : vector<2x64xf32>
    %210 = arith.divf %208, %209 : vector<2x64xf32>
    %211 = vector.extract_strided_slice %26 {offsets = [0, 3], sizes = [2, 1], strides = [1, 1]} : vector<2x8xf32> to vector<2x1xf32>
    %212 = arith.mulf %210, %167 : vector<2x64xf32>
    %213 = arith.mulf %5, %212 : vector<2x64xf32>
    %214 = vector.broadcast %211 : vector<2x1xf32> to vector<2x64xf32>
    %215 = arith.addf %214, %213 : vector<2x64xf32>
    %216 = math.tanh %215 : vector<2x64xf32>
    %217 = arith.subf %167, %216 : vector<2x64xf32>
    %218 = arith.mulf %201, %217 : vector<2x64xf32>
    %219 = arith.addf %216, %218 : vector<2x64xf32>
    %220 = vector.extract_strided_slice %32 {offsets = [0, 3], sizes = [2, 1], strides = [1, 1]} : vector<2x8xf32> to vector<2x1xf32>
    %221 = arith.mulf %7, %219 : vector<2x64xf32>
    %222 = vector.broadcast %220 : vector<2x1xf32> to vector<2x64xf32>
    %223 = arith.addf %222, %221 : vector<2x64xf32>
    %224 = arith.addf %223, %176 : vector<2x64xf32>
    %cst_28 = arith.constant dense<0xFF800000> : vector<2xf32>
    %225 = vector.multi_reduction <maximumf>, %224, %cst_28 [1] : vector<2x64xf32> to vector<2xf32>
    %226 = vector.shape_cast %225 : vector<2xf32> to vector<2x1xf32>
    %227 = vector.broadcast %226 : vector<2x1xf32> to vector<2x64xf32>
    %228 = arith.subf %224, %227 : vector<2x64xf32>
    %229 = math.exp %228 : vector<2x64xf32>
    %230 = arith.mulf %219, %229 : vector<2x64xf32>
    %231 = tpu.concatenate %229, %230 in 0 : vector<2x64xf32>, vector<2x64xf32> -> vector<4x64xf32>
    %cst_29 = arith.constant dense<0.000000e+00> : vector<4xf32>
    %232 = vector.multi_reduction <add>, %231, %cst_29 [1] : vector<4x64xf32> to vector<4xf32>
    %233 = vector.shape_cast %232 : vector<4xf32> to vector<4x1xf32>
    %234 = vector.extract_strided_slice %233 {offsets = [0, 0], sizes = [2, 1], strides = [1, 1]} : vector<4x1xf32> to vector<2x1xf32>
    %235 = vector.extract_strided_slice %233 {offsets = [2, 0], sizes = [2, 1], strides = [1, 1]} : vector<4x1xf32> to vector<2x1xf32>
    %236 = arith.divf %235, %234 : vector<2x1xf32>
    %c3_i32 = arith.constant 3 : i32
    %237 = vector.broadcast %c3_i32 : i32 to vector<2x8xi32>
    %238 = arith.cmpi eq, %35, %237 : vector<2x8xi32>
    %239 = vector.shape_cast %236 : vector<2x1xf32> to vector<2x1xf32>
    %240 = vector.broadcast %239 : vector<2x1xf32> to vector<2x8xf32>
    %241 = arith.select %238, %240, %189 : vector<2x8xi1>, vector<2x8xf32>
    %c3_30 = arith.constant 3 : index
    %c0_31 = arith.constant 0 : index
    %c0_32 = arith.constant 0 : index
    %242 = vector.load %arg4[%c3_30, %c0_31, %c0_32] : memref<8x2x64xf32, #tpu.memory_space<vmem>>, vector<1x2x64xf32>
    %243 = vector.shape_cast %242 : vector<1x2x64xf32> to vector<2x64xf32>
    %244 = vector.shape_cast %219 : vector<2x64xf32> to vector<1x2x64xf32>
    tpu.vector_store %arg4[%c3_30, %c0_31, %c0_32], %244 {strides = array<i32>} : memref<8x2x64xf32, #tpu.memory_space<vmem>>, vector<1x2x64xf32>,
    %245 = vector.extract_strided_slice %14 {offsets = [0, 4], sizes = [2, 1], strides = [1, 1]} : vector<2x8xf32> to vector<2x1xf32>
    %246 = arith.mulf %1, %219 : vector<2x64xf32>
    %247 = vector.broadcast %245 : vector<2x1xf32> to vector<2x64xf32>
    %248 = arith.addf %247, %246 : vector<2x64xf32>
    %249 = arith.negf %248 : vector<2x64xf32>
    %250 = math.exp %249 : vector<2x64xf32>
    %cst_33 = arith.constant 1.000000e+00 : f32
    %251 = vector.broadcast %cst_33 : f32 to vector<2x64xf32>
    %252 = arith.addf %251, %250 : vector<2x64xf32>
    %253 = arith.divf %251, %252 : vector<2x64xf32>
    %254 = vector.extract_strided_slice %20 {offsets = [0, 4], sizes = [2, 1], strides = [1, 1]} : vector<2x8xf32> to vector<2x1xf32>
    %255 = arith.mulf %3, %219 : vector<2x64xf32>
    %256 = vector.broadcast %254 : vector<2x1xf32> to vector<2x64xf32>
    %257 = arith.addf %256, %255 : vector<2x64xf32>
    %258 = arith.negf %257 : vector<2x64xf32>
    %259 = math.exp %258 : vector<2x64xf32>
    %cst_34 = arith.constant 1.000000e+00 : f32
    %260 = vector.broadcast %cst_34 : f32 to vector<2x64xf32>
    %261 = arith.addf %260, %259 : vector<2x64xf32>
    %262 = arith.divf %260, %261 : vector<2x64xf32>
    %263 = vector.extract_strided_slice %26 {offsets = [0, 4], sizes = [2, 1], strides = [1, 1]} : vector<2x8xf32> to vector<2x1xf32>
    %264 = arith.mulf %262, %219 : vector<2x64xf32>
    %265 = arith.mulf %5, %264 : vector<2x64xf32>
    %266 = vector.broadcast %263 : vector<2x1xf32> to vector<2x64xf32>
    %267 = arith.addf %266, %265 : vector<2x64xf32>
    %268 = math.tanh %267 : vector<2x64xf32>
    %269 = arith.subf %219, %268 : vector<2x64xf32>
    %270 = arith.mulf %253, %269 : vector<2x64xf32>
    %271 = arith.addf %268, %270 : vector<2x64xf32>
    %272 = vector.extract_strided_slice %32 {offsets = [0, 4], sizes = [2, 1], strides = [1, 1]} : vector<2x8xf32> to vector<2x1xf32>
    %273 = arith.mulf %7, %271 : vector<2x64xf32>
    %274 = vector.broadcast %272 : vector<2x1xf32> to vector<2x64xf32>
    %275 = arith.addf %274, %273 : vector<2x64xf32>
    %276 = arith.addf %275, %228 : vector<2x64xf32>
    %cst_35 = arith.constant dense<0xFF800000> : vector<2xf32>
    %277 = vector.multi_reduction <maximumf>, %276, %cst_35 [1] : vector<2x64xf32> to vector<2xf32>
    %278 = vector.shape_cast %277 : vector<2xf32> to vector<2x1xf32>
    %279 = vector.broadcast %278 : vector<2x1xf32> to vector<2x64xf32>
    %280 = arith.subf %276, %279 : vector<2x64xf32>
    %281 = math.exp %280 : vector<2x64xf32>
    %282 = arith.mulf %271, %281 : vector<2x64xf32>
    %283 = tpu.concatenate %281, %282 in 0 : vector<2x64xf32>, vector<2x64xf32> -> vector<4x64xf32>
    %cst_36 = arith.constant dense<0.000000e+00> : vector<4xf32>
    %284 = vector.multi_reduction <add>, %283, %cst_36 [1] : vector<4x64xf32> to vector<4xf32>
    %285 = vector.shape_cast %284 : vector<4xf32> to vector<4x1xf32>
    %286 = vector.extract_strided_slice %285 {offsets = [0, 0], sizes = [2, 1], strides = [1, 1]} : vector<4x1xf32> to vector<2x1xf32>
    %287 = vector.extract_strided_slice %285 {offsets = [2, 0], sizes = [2, 1], strides = [1, 1]} : vector<4x1xf32> to vector<2x1xf32>
    %288 = arith.divf %287, %286 : vector<2x1xf32>
    %c4_i32 = arith.constant 4 : i32
    %289 = vector.broadcast %c4_i32 : i32 to vector<2x8xi32>
    %290 = arith.cmpi eq, %35, %289 : vector<2x8xi32>
    %291 = vector.shape_cast %288 : vector<2x1xf32> to vector<2x1xf32>
    %292 = vector.broadcast %291 : vector<2x1xf32> to vector<2x8xf32>
    %293 = arith.select %290, %292, %241 : vector<2x8xi1>, vector<2x8xf32>
    %c4_37 = arith.constant 4 : index
    %c0_38 = arith.constant 0 : index
    %c0_39 = arith.constant 0 : index
    %294 = vector.load %arg4[%c4_37, %c0_38, %c0_39] : memref<8x2x64xf32, #tpu.memory_space<vmem>>, vector<1x2x64xf32>
    %295 = vector.shape_cast %294 : vector<1x2x64xf32> to vector<2x64xf32>
    %296 = vector.shape_cast %271 : vector<2x64xf32> to vector<1x2x64xf32>
    tpu.vector_store %arg4[%c4_37, %c0_38, %c0_39], %296 {strides = array<i32>} : memref<8x2x64xf32, #tpu.memory_space<vmem>>, vector<1x2x64xf32>,
    %297 = vector.extract_strided_slice %14 {offsets = [0, 5], sizes = [2, 1], strides = [1, 1]} : vector<2x8xf32> to vector<2x1xf32>
    %298 = arith.mulf %1, %271 : vector<2x64xf32>
    %299 = vector.broadcast %297 : vector<2x1xf32> to vector<2x64xf32>
    %300 = arith.addf %299, %298 : vector<2x64xf32>
    %301 = arith.negf %300 : vector<2x64xf32>
    %302 = math.exp %301 : vector<2x64xf32>
    %cst_40 = arith.constant 1.000000e+00 : f32
    %303 = vector.broadcast %cst_40 : f32 to vector<2x64xf32>
    %304 = arith.addf %303, %302 : vector<2x64xf32>
    %305 = arith.divf %303, %304 : vector<2x64xf32>
    %306 = vector.extract_strided_slice %20 {offsets = [0, 5], sizes = [2, 1], strides = [1, 1]} : vector<2x8xf32> to vector<2x1xf32>
    %307 = arith.mulf %3, %271 : vector<2x64xf32>
    %308 = vector.broadcast %306 : vector<2x1xf32> to vector<2x64xf32>
    %309 = arith.addf %308, %307 : vector<2x64xf32>
    %310 = arith.negf %309 : vector<2x64xf32>
    %311 = math.exp %310 : vector<2x64xf32>
    %cst_41 = arith.constant 1.000000e+00 : f32
    %312 = vector.broadcast %cst_41 : f32 to vector<2x64xf32>
    %313 = arith.addf %312, %311 : vector<2x64xf32>
    %314 = arith.divf %312, %313 : vector<2x64xf32>
    %315 = vector.extract_strided_slice %26 {offsets = [0, 5], sizes = [2, 1], strides = [1, 1]} : vector<2x8xf32> to vector<2x1xf32>
    %316 = arith.mulf %314, %271 : vector<2x64xf32>
    %317 = arith.mulf %5, %316 : vector<2x64xf32>
    %318 = vector.broadcast %315 : vector<2x1xf32> to vector<2x64xf32>
    %319 = arith.addf %318, %317 : vector<2x64xf32>
    %320 = math.tanh %319 : vector<2x64xf32>
    %321 = arith.subf %271, %320 : vector<2x64xf32>
    %322 = arith.mulf %305, %321 : vector<2x64xf32>
    %323 = arith.addf %320, %322 : vector<2x64xf32>
    %324 = vector.extract_strided_slice %32 {offsets = [0, 5], sizes = [2, 1], strides = [1, 1]} : vector<2x8xf32> to vector<2x1xf32>
    %325 = arith.mulf %7, %323 : vector<2x64xf32>
    %326 = vector.broadcast %324 : vector<2x1xf32> to vector<2x64xf32>
    %327 = arith.addf %326, %325 : vector<2x64xf32>
    %328 = arith.addf %327, %280 : vector<2x64xf32>
    %cst_42 = arith.constant dense<0xFF800000> : vector<2xf32>
    %329 = vector.multi_reduction <maximumf>, %328, %cst_42 [1] : vector<2x64xf32> to vector<2xf32>
    %330 = vector.shape_cast %329 : vector<2xf32> to vector<2x1xf32>
    %331 = vector.broadcast %330 : vector<2x1xf32> to vector<2x64xf32>
    %332 = arith.subf %328, %331 : vector<2x64xf32>
    %333 = math.exp %332 : vector<2x64xf32>
    %334 = arith.mulf %323, %333 : vector<2x64xf32>
    %335 = tpu.concatenate %333, %334 in 0 : vector<2x64xf32>, vector<2x64xf32> -> vector<4x64xf32>
    %cst_43 = arith.constant dense<0.000000e+00> : vector<4xf32>
    %336 = vector.multi_reduction <add>, %335, %cst_43 [1] : vector<4x64xf32> to vector<4xf32>
    %337 = vector.shape_cast %336 : vector<4xf32> to vector<4x1xf32>
    %338 = vector.extract_strided_slice %337 {offsets = [0, 0], sizes = [2, 1], strides = [1, 1]} : vector<4x1xf32> to vector<2x1xf32>
    %339 = vector.extract_strided_slice %337 {offsets = [2, 0], sizes = [2, 1], strides = [1, 1]} : vector<4x1xf32> to vector<2x1xf32>
    %340 = arith.divf %339, %338 : vector<2x1xf32>
    %c5_i32 = arith.constant 5 : i32
    %341 = vector.broadcast %c5_i32 : i32 to vector<2x8xi32>
    %342 = arith.cmpi eq, %35, %341 : vector<2x8xi32>
    %343 = vector.shape_cast %340 : vector<2x1xf32> to vector<2x1xf32>
    %344 = vector.broadcast %343 : vector<2x1xf32> to vector<2x8xf32>
    %345 = arith.select %342, %344, %293 : vector<2x8xi1>, vector<2x8xf32>
    %c5_44 = arith.constant 5 : index
    %c0_45 = arith.constant 0 : index
    %c0_46 = arith.constant 0 : index
    %346 = vector.load %arg4[%c5_44, %c0_45, %c0_46] : memref<8x2x64xf32, #tpu.memory_space<vmem>>, vector<1x2x64xf32>
    %347 = vector.shape_cast %346 : vector<1x2x64xf32> to vector<2x64xf32>
    %348 = vector.shape_cast %323 : vector<2x64xf32> to vector<1x2x64xf32>
    tpu.vector_store %arg4[%c5_44, %c0_45, %c0_46], %348 {strides = array<i32>} : memref<8x2x64xf32, #tpu.memory_space<vmem>>, vector<1x2x64xf32>,
    %349 = vector.extract_strided_slice %14 {offsets = [0, 6], sizes = [2, 1], strides = [1, 1]} : vector<2x8xf32> to vector<2x1xf32>
    %350 = arith.mulf %1, %323 : vector<2x64xf32>
    %351 = vector.broadcast %349 : vector<2x1xf32> to vector<2x64xf32>
    %352 = arith.addf %351, %350 : vector<2x64xf32>
    %353 = arith.negf %352 : vector<2x64xf32>
    %354 = math.exp %353 : vector<2x64xf32>
    %cst_47 = arith.constant 1.000000e+00 : f32
    %355 = vector.broadcast %cst_47 : f32 to vector<2x64xf32>
    %356 = arith.addf %355, %354 : vector<2x64xf32>
    %357 = arith.divf %355, %356 : vector<2x64xf32>
    %358 = vector.extract_strided_slice %20 {offsets = [0, 6], sizes = [2, 1], strides = [1, 1]} : vector<2x8xf32> to vector<2x1xf32>
    %359 = arith.mulf %3, %323 : vector<2x64xf32>
    %360 = vector.broadcast %358 : vector<2x1xf32> to vector<2x64xf32>
    %361 = arith.addf %360, %359 : vector<2x64xf32>
    %362 = arith.negf %361 : vector<2x64xf32>
    %363 = math.exp %362 : vector<2x64xf32>
    %cst_48 = arith.constant 1.000000e+00 : f32
    %364 = vector.broadcast %cst_48 : f32 to vector<2x64xf32>
    %365 = arith.addf %364, %363 : vector<2x64xf32>
    %366 = arith.divf %364, %365 : vector<2x64xf32>
    %367 = vector.extract_strided_slice %26 {offsets = [0, 6], sizes = [2, 1], strides = [1, 1]} : vector<2x8xf32> to vector<2x1xf32>
    %368 = arith.mulf %366, %323 : vector<2x64xf32>
    %369 = arith.mulf %5, %368 : vector<2x64xf32>
    %370 = vector.broadcast %367 : vector<2x1xf32> to vector<2x64xf32>
    %371 = arith.addf %370, %369 : vector<2x64xf32>
    %372 = math.tanh %371 : vector<2x64xf32>
    %373 = arith.subf %323, %372 : vector<2x64xf32>
    %374 = arith.mulf %357, %373 : vector<2x64xf32>
    %375 = arith.addf %372, %374 : vector<2x64xf32>
    %376 = vector.extract_strided_slice %32 {offsets = [0, 6], sizes = [2, 1], strides = [1, 1]} : vector<2x8xf32> to vector<2x1xf32>
    %377 = arith.mulf %7, %375 : vector<2x64xf32>
    %378 = vector.broadcast %376 : vector<2x1xf32> to vector<2x64xf32>
    %379 = arith.addf %378, %377 : vector<2x64xf32>
    %380 = arith.addf %379, %332 : vector<2x64xf32>
    %cst_49 = arith.constant dense<0xFF800000> : vector<2xf32>
    %381 = vector.multi_reduction <maximumf>, %380, %cst_49 [1] : vector<2x64xf32> to vector<2xf32>
    %382 = vector.shape_cast %381 : vector<2xf32> to vector<2x1xf32>
    %383 = vector.broadcast %382 : vector<2x1xf32> to vector<2x64xf32>
    %384 = arith.subf %380, %383 : vector<2x64xf32>
    %385 = math.exp %384 : vector<2x64xf32>
    %386 = arith.mulf %375, %385 : vector<2x64xf32>
    %387 = tpu.concatenate %385, %386 in 0 : vector<2x64xf32>, vector<2x64xf32> -> vector<4x64xf32>
    %cst_50 = arith.constant dense<0.000000e+00> : vector<4xf32>
    %388 = vector.multi_reduction <add>, %387, %cst_50 [1] : vector<4x64xf32> to vector<4xf32>
    %389 = vector.shape_cast %388 : vector<4xf32> to vector<4x1xf32>
    %390 = vector.extract_strided_slice %389 {offsets = [0, 0], sizes = [2, 1], strides = [1, 1]} : vector<4x1xf32> to vector<2x1xf32>
    %391 = vector.extract_strided_slice %389 {offsets = [2, 0], sizes = [2, 1], strides = [1, 1]} : vector<4x1xf32> to vector<2x1xf32>
    %392 = arith.divf %391, %390 : vector<2x1xf32>
    %c6_i32 = arith.constant 6 : i32
    %393 = vector.broadcast %c6_i32 : i32 to vector<2x8xi32>
    %394 = arith.cmpi eq, %35, %393 : vector<2x8xi32>
    %395 = vector.shape_cast %392 : vector<2x1xf32> to vector<2x1xf32>
    %396 = vector.broadcast %395 : vector<2x1xf32> to vector<2x8xf32>
    %397 = arith.select %394, %396, %345 : vector<2x8xi1>, vector<2x8xf32>
    %c6_51 = arith.constant 6 : index
    %c0_52 = arith.constant 0 : index
    %c0_53 = arith.constant 0 : index
    %398 = vector.load %arg4[%c6_51, %c0_52, %c0_53] : memref<8x2x64xf32, #tpu.memory_space<vmem>>, vector<1x2x64xf32>
    %399 = vector.shape_cast %398 : vector<1x2x64xf32> to vector<2x64xf32>
    %400 = vector.shape_cast %375 : vector<2x64xf32> to vector<1x2x64xf32>
    tpu.vector_store %arg4[%c6_51, %c0_52, %c0_53], %400 {strides = array<i32>} : memref<8x2x64xf32, #tpu.memory_space<vmem>>, vector<1x2x64xf32>,
    %401 = vector.extract_strided_slice %14 {offsets = [0, 7], sizes = [2, 1], strides = [1, 1]} : vector<2x8xf32> to vector<2x1xf32>
    %402 = arith.mulf %1, %375 : vector<2x64xf32>
    %403 = vector.broadcast %401 : vector<2x1xf32> to vector<2x64xf32>
    %404 = arith.addf %403, %402 : vector<2x64xf32>
    %405 = arith.negf %404 : vector<2x64xf32>
    %406 = math.exp %405 : vector<2x64xf32>
    %cst_54 = arith.constant 1.000000e+00 : f32
    %407 = vector.broadcast %cst_54 : f32 to vector<2x64xf32>
    %408 = arith.addf %407, %406 : vector<2x64xf32>
    %409 = arith.divf %407, %408 : vector<2x64xf32>
    %410 = vector.extract_strided_slice %20 {offsets = [0, 7], sizes = [2, 1], strides = [1, 1]} : vector<2x8xf32> to vector<2x1xf32>
    %411 = arith.mulf %3, %375 : vector<2x64xf32>
    %412 = vector.broadcast %410 : vector<2x1xf32> to vector<2x64xf32>
    %413 = arith.addf %412, %411 : vector<2x64xf32>
    %414 = arith.negf %413 : vector<2x64xf32>
    %415 = math.exp %414 : vector<2x64xf32>
    %cst_55 = arith.constant 1.000000e+00 : f32
    %416 = vector.broadcast %cst_55 : f32 to vector<2x64xf32>
    %417 = arith.addf %416, %415 : vector<2x64xf32>
    %418 = arith.divf %416, %417 : vector<2x64xf32>
    %419 = vector.extract_strided_slice %26 {offsets = [0, 7], sizes = [2, 1], strides = [1, 1]} : vector<2x8xf32> to vector<2x1xf32>
    %420 = arith.mulf %418, %375 : vector<2x64xf32>
    %421 = arith.mulf %5, %420 : vector<2x64xf32>
    %422 = vector.broadcast %419 : vector<2x1xf32> to vector<2x64xf32>
    %423 = arith.addf %422, %421 : vector<2x64xf32>
    %424 = math.tanh %423 : vector<2x64xf32>
    %425 = arith.subf %375, %424 : vector<2x64xf32>
    %426 = arith.mulf %409, %425 : vector<2x64xf32>
    %427 = arith.addf %424, %426 : vector<2x64xf32>
    %428 = vector.extract_strided_slice %32 {offsets = [0, 7], sizes = [2, 1], strides = [1, 1]} : vector<2x8xf32> to vector<2x1xf32>
    %429 = arith.mulf %7, %427 : vector<2x64xf32>
    %430 = vector.broadcast %428 : vector<2x1xf32> to vector<2x64xf32>
    %431 = arith.addf %430, %429 : vector<2x64xf32>
    %432 = arith.addf %431, %384 : vector<2x64xf32>
    %cst_56 = arith.constant dense<0xFF800000> : vector<2xf32>
    %433 = vector.multi_reduction <maximumf>, %432, %cst_56 [1] : vector<2x64xf32> to vector<2xf32>
    %434 = vector.shape_cast %433 : vector<2xf32> to vector<2x1xf32>
    %435 = vector.broadcast %434 : vector<2x1xf32> to vector<2x64xf32>
    %436 = arith.subf %432, %435 : vector<2x64xf32>
    %437 = math.exp %436 : vector<2x64xf32>
    %438 = arith.mulf %427, %437 : vector<2x64xf32>
    %439 = tpu.concatenate %437, %438 in 0 : vector<2x64xf32>, vector<2x64xf32> -> vector<4x64xf32>
    %cst_57 = arith.constant dense<0.000000e+00> : vector<4xf32>
    %440 = vector.multi_reduction <add>, %439, %cst_57 [1] : vector<4x64xf32> to vector<4xf32>
    %441 = vector.shape_cast %440 : vector<4xf32> to vector<4x1xf32>
    %442 = vector.extract_strided_slice %441 {offsets = [0, 0], sizes = [2, 1], strides = [1, 1]} : vector<4x1xf32> to vector<2x1xf32>
    %443 = vector.extract_strided_slice %441 {offsets = [2, 0], sizes = [2, 1], strides = [1, 1]} : vector<4x1xf32> to vector<2x1xf32>
    %444 = arith.divf %443, %442 : vector<2x1xf32>
    %c7_i32 = arith.constant 7 : i32
    %445 = vector.broadcast %c7_i32 : i32 to vector<2x8xi32>
    %446 = arith.cmpi eq, %35, %445 : vector<2x8xi32>
    %447 = vector.shape_cast %444 : vector<2x1xf32> to vector<2x1xf32>
    %448 = vector.broadcast %447 : vector<2x1xf32> to vector<2x8xf32>
    %449 = arith.select %446, %448, %397 : vector<2x8xi1>, vector<2x8xf32>
    %c7_58 = arith.constant 7 : index
    %c0_59 = arith.constant 0 : index
    %c0_60 = arith.constant 0 : index
    %450 = vector.load %arg4[%c7_58, %c0_59, %c0_60] : memref<8x2x64xf32, #tpu.memory_space<vmem>>, vector<1x2x64xf32>
    %451 = vector.shape_cast %450 : vector<1x2x64xf32> to vector<2x64xf32>
    %452 = vector.shape_cast %427 : vector<2x64xf32> to vector<1x2x64xf32>
    tpu.vector_store %arg4[%c7_58, %c0_59, %c0_60], %452 {strides = array<i32>} : memref<8x2x64xf32, #tpu.memory_space<vmem>>, vector<1x2x64xf32>,
    %c0_61 = arith.constant 0 : index
    %c0_62 = arith.constant 0 : index
    %453 = vector.load %arg3[%c0_61, %c0_62] : memref<2x8xf32, #tpu.memory_space<vmem>>, vector<2x8xf32>
    tpu.vector_store %arg3[%c0_61, %c0_62], %449 {strides = array<i32>} : memref<2x8xf32, #tpu.memory_space<vmem>>, vector<2x8xf32>,
    return
  }
}

</mosaic_0001>

<llo_original>
// kernel: harvey_svpf_forward.1
$region0: #{harvey_svpf_forward.1}
  #allocation0 [shape = 'u32[]', space=smem, size = 0x4, offset = 0x4, fixed_abs, tag = 'smem constant byte address 0x4 - core index']
  #allocation1 [shape = 'u32[144,128]{1,0:T(1,128)}', space=vmem, size = 0x12000, scoped, tag = 'internal scratch']
  %s0 = inlined_call_operand.vmem [shape: f32[12], index: 0, kind: input, shape index: {}]
  %s1 = inlined_call_operand.vmem [shape: f32[2,8], index: 1, kind: input, shape index: {}]
  %s2 = inlined_call_operand.vmem [shape: f32[2,64], index: 2, kind: input, shape index: {}]
  %s3 = inlined_call_operand.hbm [shape: f32[2,8], index: 3, kind: output, shape index: {0}]
  %s4 = inlined_call_operand.vmem [shape: f32[8,2,64], index: 4, kind: output, shape index: {1}]
  %5 = xla_tuple %s3, %s4
  %s6 = sld [smem:[#allocation0]]
  $region34: #{harvey_svpf_forward.1} parent=0
    _
  %s8 = ssub.s32 1, %s6
  %s9 = scalar_select 0, %s8, %s6
  $region1: #{harvey_svpf_forward.1} parent=0
    #allocation2 [shape = 'u8[512]{0}', space=smem, size = 0x200, scoped, tag = 'input window, operand 0, single buffered']
    #allocation3 [shape = 's32[1]{0}', space=sflag, size = 0x4, scoped, tag = 'scoped memory for harvey_svpf_forward.1']
    #allocation4 [shape = 's32[1]{0}', space=sflag, size = 0x4, scoped, tag = 'scoped memory for harvey_svpf_forward.1']
    #allocation5 [shape = 'u8[1024]{0}', space=vmem, size = 0x400, scoped, tag = 'output window, operand 0, single buffered']
    %10 = vsyncpa [#allocation4], 0
    %11 = vsyncpa [#allocation3], 0
    // Predicated region
    $region2: #{harvey_svpf_forward.1} parent=1 // pred_check
      _
    $region3: #{harvey_svpf_forward.1} parent=1 // pred_check_branch
      %13 = sbr.rel (0) target = $region5
    $region4: #{harvey_svpf_forward.1} parent=1 // pred_region
      %s15 = ssub.s32 16, 16
      %16 = vsyncadd [#allocation4], %s15
      %s18 = sshll.u32 %s0, 4
      %s19 = int_to_ptr.vmem [resolvable:$true] %s18
      %21 = dma.vmem_to_smem %s19, 16, [#allocation2], [#allocation4]
    $region5: #{harvey_svpf_forward.1} parent=1 // pred_fallthru
      _
    // Predicated region
    $region6: #{harvey_svpf_forward.1} parent=1 // pred_check
      _
    $region7: #{harvey_svpf_forward.1} parent=1 // pred_check_branch
      %23 = sbr.rel (0) target = $region9
    $region8: #{harvey_svpf_forward.1} parent=1 // pred_region
      _
    $region9: #{harvey_svpf_forward.1} parent=1 // pred_fallthru
      _
    // Predicated region
    $region10: #{harvey_svpf_forward.1} parent=1 // pred_check
      _
    $region11: #{harvey_svpf_forward.1} parent=1 // pred_check_branch
      %25 = sbr.rel (0) target = $region13
    $region12: #{harvey_svpf_forward.1} parent=1 // pred_region
      _
    $region13: #{harvey_svpf_forward.1} parent=1 // pred_fallthru
      _
    // Predicated region
    $region14: #{harvey_svpf_forward.1} parent=1 // pred_check
      _
    $region15: #{harvey_svpf_forward.1} parent=1 // pred_check_branch
      %27 = sbr.rel (0) target = $region17
    $region16: #{harvey_svpf_forward.1} parent=1 // pred_region
      %28 = dma.done [#allocation4], 16
    $region17: #{harvey_svpf_forward.1} parent=1 // pred_fallthru
      _
    %29 = sfence
    %s30 = sld [smem:[#allocation2 + $0x1]]
    %v31 = vstv %s30
    %s32 = sld [smem:[#allocation2 + $0x4]]
    %v33 = vstv %s32
    %s34 = sld [smem:[#allocation2 + $0x7]]
    %v35 = vstv %s34
    %s36 = sld [smem:[#allocation2 + $0xa]]
    %v37 = vstv %s36
    %v38 = vld [vmem:[%s1] sm:$0x3]
    %s39 = sld [smem:[#allocation2]]
    %v40 = vstv %s39
    %v41 = vmul.f32 %v40, %v38
    %s42 = sld [smem:[#allocation2 + $0x2]]
    %v43 = vstv %s42
    %v44 = vadd.f32 %v41, %v43
    %s45 = sld [smem:[#allocation2 + $0x3]]
    %v46 = vstv %s45
    %v47 = vmul.f32 %v46, %v38
    %s48 = sld [smem:[#allocation2 + $0x5]]
    %v49 = vstv %s48
    %v50 = vadd.f32 %v47, %v49
    %s51 = sld [smem:[#allocation2 + $0x6]]
    %v52 = vstv %s51
    %v53 = vmul.f32 %v52, %v38
    %s54 = sld [smem:[#allocation2 + $0x8]]
    %v55 = vstv %s54
    %v56 = vadd.f32 %v53, %v55
    %s57 = sld [smem:[#allocation2 + $0x9]]
    %v58 = vstv %s57
    %v59 = vmul.f32 %v58, %v38
    %s60 = sld [smem:[#allocation2 + $0xb]]
    %v61 = vstv %s60
    %v62 = vadd.f32 %v59, %v61
    %v63 = vld [vmem:[%s2] sm:$0x3]
    %v64 = vlaneseq
    %v65 = vand.u32 %v64, 127
    %v66 = vmul.f32 %v31, %v63
    %68 = vset.pattern.permute.xlu0 0
    %69 = vperm.xlu0 %68, %v44
    %v70 = vpop.permute.xlu0 %69
    %v72 = vadd.f32 %v70, %v66
    %v73 = vxor.u32 %v72, 2147483648
    %v74 = vmul.f32 %v73, 1.442695
    %v75 = vpow.pop %v74
    %v76 = vadd.f32 %v75, 1.0
    %v77 = vrcp.pop %v76
    %v78 = vmul.f32 1.0, %v77
    %v79 = vmul.f32 %v33, %v63
    %81 = vset.pattern.permute.xlu0 0
    %82 = vperm.xlu0 %81, %v50
    %v83 = vpop.permute.xlu0 %82
    %v85 = vadd.f32 %v83, %v79
    %v86 = vxor.u32 %v85, 2147483648
    %v87 = vmul.f32 %v86, 1.442695
    %v88 = vpow.pop %v87
    %v89 = vadd.f32 %v88, 1.0
    %v90 = vrcp.pop %v89
    %v91 = vmul.f32 1.0, %v90
    %v92 = vmul.f32 %v91, %v63
    %v93 = vmul.f32 %v35, %v92
    %95 = vset.pattern.permute.xlu0 0
    %96 = vperm.xlu0 %95, %v56
    %v97 = vpop.permute.xlu0 %96
    %v99 = vadd.f32 %v97, %v93
    %v100 = vtanh.pop %v99
    %v101 = vsub.f32 %v63, %v100
    %v102 = vmul.f32 %v78, %v101
    %v103 = vadd.f32 %v100, %v102
    %v104 = vmul.f32 %v37, %v103
    %106 = vset.pattern.permute.xlu0 0
    %107 = vperm.xlu0 %106, %v62
    %v108 = vpop.permute.xlu0 %107
    %v110 = vadd.f32 %v108, %v104
    %v111 = vadd.f32 %v110, 0.0
    %vm112 = vcmask 517120
    %v113 = vsel %vm112, %v111, -inf
    %114 = vmax.xlane.f32.xlu0 %v113
    %v115 = vpop.xlane.xlu0 %114
    %v116 = vsub.f32 %v111, %v115
    %v117 = vmul.f32 %v116, 1.442695
    %v118 = vpow.pop %v117
    %v119 = vmul.f32 %v103, %v118
    %v121 = vrot.slane %v119, 6
    %vm123 = vcmask 1041408
    %v124 = vsel %vm123, %v118, %v121
    %vm125 = vcmask 519168
    %v126 = vsel %vm125, %v124, 0.0
    %127 = vadd.xlane.f32.xlu0 %v126
    %v128 = vpop.xlane.xlu0 %127
    %v130 = vrot.slane %v128, 6
    %v132 = vrcp.pop %v130
    %v133 = vmul.f32 %v128, %v132
    %vm134 = vcmp.eq.s32.totalorder %v65, 0
    %136 = vset.pattern.permute.xlu0 0
    %137 = vperm.xlu0 %136, %v133
    %v138 = vpop.permute.xlu0 %137
    %v140 = vsel %vm134, %v138, 0.0
    %141 = vst.msk [vmem:[%s4] sm:$0x3] %vm112, %v103
    %v142 = vmul.f32 %v31, %v103
    %143 = vset.pattern.permute.xlu0 1
    %144 = vperm.xlu0 %143, %v44
    %v145 = vpop.permute.xlu0 %144
    %v147 = vadd.f32 %v145, %v142
    %v148 = vxor.u32 %v147, 2147483648
    %v149 = vmul.f32 %v148, 1.442695
    %v150 = vpow.pop %v149
    %v151 = vadd.f32 %v150, 1.0
    %v152 = vrcp.pop %v151
    %v153 = vmul.f32 1.0, %v152
    %v154 = vmul.f32 %v33, %v103
    %155 = vset.pattern.permute.xlu0 1
    %156 = vperm.xlu0 %155, %v50
    %v157 = vpop.permute.xlu0 %156
    %v159 = vadd.f32 %v157, %v154
    %v160 = vxor.u32 %v159, 2147483648
    %v161 = vmul.f32 %v160, 1.442695
    %v162 = vpow.pop %v161
    %v163 = vadd.f32 %v162, 1.0
    %v164 = vrcp.pop %v163
    %v165 = vmul.f32 1.0, %v164
    %v166 = vmul.f32 %v165, %v103
    %v167 = vmul.f32 %v35, %v166
    %168 = vset.pattern.permute.xlu0 1
    %169 = vperm.xlu0 %168, %v56
    %v170 = vpop.permute.xlu0 %169
    %v172 = vadd.f32 %v170, %v167
    %v173 = vtanh.pop %v172
    %v174 = vsub.f32 %v103, %v173
    %v175 = vmul.f32 %v153, %v174
    %v176 = vadd.f32 %v173, %v175
    %v177 = vmul.f32 %v37, %v176
    %178 = vset.pattern.permute.xlu0 1
    %179 = vperm.xlu0 %178, %v62
    %v180 = vpop.permute.xlu0 %179
    %v182 = vadd.f32 %v180, %v177
    %v183 = vadd.f32 %v182, %v116
    %v184 = vsel %vm112, %v183, -inf
    %185 = vmax.xlane.f32.xlu0 %v184
    %v186 = vpop.xlane.xlu0 %185
    %v187 = vsub.f32 %v183, %v186
    %v188 = vmul.f32 %v187, 1.442695
    %v189 = vpow.pop %v188
    %v190 = vmul.f32 %v176, %v189
    %v192 = vrot.slane %v190, 6
    %v194 = vsel %vm123, %v189, %v192
    %v195 = vsel %vm125, %v194, 0.0
    %196 = vadd.xlane.f32.xlu0 %v195
    %v197 = vpop.xlane.xlu0 %196
    %v199 = vrot.slane %v197, 6
    %v201 = vrcp.pop %v199
    %v202 = vmul.f32 %v197, %v201
    %vm203 = vcmp.eq.s32.totalorder %v65, 1
    %205 = vset.pattern.permute.xlu0 0
    %206 = vperm.xlu0 %205, %v202
    %v207 = vpop.permute.xlu0 %206
    %v209 = vsel %vm203, %v207, %v140
    %s210 = scalar_lea.vmem %s4, 2
    %211 = vst.msk [vmem:[%s210] sm:$0x3] %vm112, %v176
    %v212 = vmul.f32 %v31, %v176
    %213 = vset.pattern.permute.xlu0 2
    %214 = vperm.xlu0 %213, %v44
    %v215 = vpop.permute.xlu0 %214
    %v217 = vadd.f32 %v215, %v212
    %v218 = vxor.u32 %v217, 2147483648
    %v219 = vmul.f32 %v218, 1.442695
    %v220 = vpow.pop %v219
    %v221 = vadd.f32 %v220, 1.0
    %v222 = vrcp.pop %v221
    %v223 = vmul.f32 1.0, %v222
    %v224 = vmul.f32 %v33, %v176
    %225 = vset.pattern.permute.xlu0 2
    %226 = vperm.xlu0 %225, %v50
    %v227 = vpop.permute.xlu0 %226
    %v229 = vadd.f32 %v227, %v224
    %v230 = vxor.u32 %v229, 2147483648
    %v231 = vmul.f32 %v230, 1.442695
    %v232 = vpow.pop %v231
    %v233 = vadd.f32 %v232, 1.0
    %v234 = vrcp.pop %v233
    %v235 = vmul.f32 1.0, %v234
    %v236 = vmul.f32 %v235, %v176
    %v237 = vmul.f32 %v35, %v236
    %238 = vset.pattern.permute.xlu0 2
    %239 = vperm.xlu0 %238, %v56
    %v240 = vpop.permute.xlu0 %239
    %v242 = vadd.f32 %v240, %v237
    %v243 = vtanh.pop %v242
    %v244 = vsub.f32 %v176, %v243
    %v245 = vmul.f32 %v223, %v244
    %v246 = vadd.f32 %v243, %v245
    %v247 = vmul.f32 %v37, %v246
    %248 = vset.pattern.permute.xlu0 2
    %249 = vperm.xlu0 %248, %v62
    %v250 = vpop.permute.xlu0 %249
    %v252 = vadd.f32 %v250, %v247
    %v253 = vadd.f32 %v252, %v187
    %v254 = vsel %vm112, %v253, -inf
    %255 = vmax.xlane.f32.xlu0 %v254
    %v256 = vpop.xlane.xlu0 %255
    %v257 = vsub.f32 %v253, %v256
    %v258 = vmul.f32 %v257, 1.442695
    %v259 = vpow.pop %v258
    %v260 = vmul.f32 %v246, %v259
    %v262 = vrot.slane %v260, 6
    %v264 = vsel %vm123, %v259, %v262
    %v265 = vsel %vm125, %v264, 0.0
    %266 = vadd.xlane.f32.xlu0 %v265
    %v267 = vpop.xlane.xlu0 %266
    %v269 = vrot.slane %v267, 6
    %v271 = vrcp.pop %v269
    %v272 = vmul.f32 %v267, %v271
    %vm273 = vcmp.eq.s32.totalorder %v65, 2
    %275 = vset.pattern.permute.xlu0 0
    %276 = vperm.xlu0 %275, %v272
    %v277 = vpop.permute.xlu0 %276
    %v279 = vsel %vm273, %v277, %v209
    %s280 = scalar_lea.vmem %s4, 4
    %281 = vst.msk [vmem:[%s280] sm:$0x3] %vm112, %v246
    %v282 = vmul.f32 %v31, %v246
    %283 = vset.pattern.permute.xlu0 3
    %284 = vperm.xlu0 %283, %v44
    %v285 = vpop.permute.xlu0 %284
    %v287 = vadd.f32 %v285, %v282
    %v288 = vxor.u32 %v287, 2147483648
    %v289 = vmul.f32 %v288, 1.442695
    %v290 = vpow.pop %v289
    %v291 = vadd.f32 %v290, 1.0
    %v292 = vrcp.pop %v291
    %v293 = vmul.f32 1.0, %v292
    %v294 = vmul.f32 %v33, %v246
    %295 = vset.pattern.permute.xlu0 3
    %296 = vperm.xlu0 %295, %v50
    %v297 = vpop.permute.xlu0 %296
    %v299 = vadd.f32 %v297, %v294
    %v300 = vxor.u32 %v299, 2147483648
    %v301 = vmul.f32 %v300, 1.442695
    %v302 = vpow.pop %v301
    %v303 = vadd.f32 %v302, 1.0
    %v304 = vrcp.pop %v303
    %v305 = vmul.f32 1.0, %v304
    %v306 = vmul.f32 %v305, %v246
    %v307 = vmul.f32 %v35, %v306
    %308 = vset.pattern.permute.xlu0 3
    %309 = vperm.xlu0 %308, %v56
    %v310 = vpop.permute.xlu0 %309
    %v312 = vadd.f32 %v310, %v307
    %v313 = vtanh.pop %v312
    %v314 = vsub.f32 %v246, %v313
    %v315 = vmul.f32 %v293, %v314
    %v316 = vadd.f32 %v313, %v315
    %v317 = vmul.f32 %v37, %v316
    %318 = vset.pattern.permute.xlu0 3
    %319 = vperm.xlu0 %318, %v62
    %v320 = vpop.permute.xlu0 %319
    %v322 = vadd.f32 %v320, %v317
    %v323 = vadd.f32 %v322, %v257
    %v324 = vsel %vm112, %v323, -inf
    %325 = vmax.xlane.f32.xlu0 %v324
    %v326 = vpop.xlane.xlu0 %325
    %v327 = vsub.f32 %v323, %v326
    %v328 = vmul.f32 %v327, 1.442695
    %v329 = vpow.pop %v328
    %v330 = vmul.f32 %v316, %v329
    %v332 = vrot.slane %v330, 6
    %v334 = vsel %vm123, %v329, %v332
    %v335 = vsel %vm125, %v334, 0.0
    %336 = vadd.xlane.f32.xlu0 %v335
    %v337 = vpop.xlane.xlu0 %336
    %v339 = vrot.slane %v337, 6
    %v341 = vrcp.pop %v339
    %v342 = vmul.f32 %v337, %v341
    %vm343 = vcmp.eq.s32.totalorder %v65, 3
    %345 = vset.pattern.permute.xlu0 0
    %346 = vperm.xlu0 %345, %v342
    %v347 = vpop.permute.xlu0 %346
    %v349 = vsel %vm343, %v347, %v279
    %s350 = scalar_lea.vmem %s4, 6
    %351 = vst.msk [vmem:[%s350] sm:$0x3] %vm112, %v316
    %v352 = vmul.f32 %v31, %v316
    %353 = vset.pattern.permute.xlu0 4
    %354 = vperm.xlu0 %353, %v44
    %v355 = vpop.permute.xlu0 %354
    %v357 = vadd.f32 %v355, %v352
    %v358 = vxor.u32 %v357, 2147483648
    %v359 = vmul.f32 %v358, 1.442695
    %v360 = vpow.pop %v359
    %v361 = vadd.f32 %v360, 1.0
    %v362 = vrcp.pop %v361
    %v363 = vmul.f32 1.0, %v362
    %v364 = vmul.f32 %v33, %v316
    %365 = vset.pattern.permute.xlu0 4
    %366 = vperm.xlu0 %365, %v50
    %v367 = vpop.permute.xlu0 %366
    %v369 = vadd.f32 %v367, %v364
    %v370 = vxor.u32 %v369, 2147483648
    %v371 = vmul.f32 %v370, 1.442695
    %v372 = vpow.pop %v371
    %v373 = vadd.f32 %v372, 1.0
    %v374 = vrcp.pop %v373
    %v375 = vmul.f32 1.0, %v374
    %v376 = vmul.f32 %v375, %v316
    %v377 = vmul.f32 %v35, %v376
    %378 = vset.pattern.permute.xlu0 4
    %379 = vperm.xlu0 %378, %v56
    %v380 = vpop.permute.xlu0 %379
    %v382 = vadd.f32 %v380, %v377
    %v383 = vtanh.pop %v382
    %v384 = vsub.f32 %v316, %v383
    %v385 = vmul.f32 %v363, %v384
    %v386 = vadd.f32 %v383, %v385
    %v387 = vmul.f32 %v37, %v386
    %388 = vset.pattern.permute.xlu0 4
    %389 = vperm.xlu0 %388, %v62
    %v390 = vpop.permute.xlu0 %389
    %v392 = vadd.f32 %v390, %v387
    %v393 = vadd.f32 %v392, %v327
    %v394 = vsel %vm112, %v393, -inf
    %395 = vmax.xlane.f32.xlu0 %v394
    %v396 = vpop.xlane.xlu0 %395
    %v397 = vsub.f32 %v393, %v396
    %v398 = vmul.f32 %v397, 1.442695
    %v399 = vpow.pop %v398
    %v400 = vmul.f32 %v386, %v399
    %v402 = vrot.slane %v400, 6
    %v404 = vsel %vm123, %v399, %v402
    %v405 = vsel %vm125, %v404, 0.0
    %406 = vadd.xlane.f32.xlu0 %v405
    %v407 = vpop.xlane.xlu0 %406
    %v409 = vrot.slane %v407, 6
    %v411 = vrcp.pop %v409
    %v412 = vmul.f32 %v407, %v411
    %vm413 = vcmp.eq.s32.totalorder %v65, 4
    %415 = vset.pattern.permute.xlu0 0
    %416 = vperm.xlu0 %415, %v412
    %v417 = vpop.permute.xlu0 %416
    %v419 = vsel %vm413, %v417, %v349
    %s420 = scalar_lea.vmem %s4, 8
    %421 = vst.msk [vmem:[%s420] sm:$0x3] %vm112, %v386
    %v422 = vmul.f32 %v31, %v386
    %423 = vset.pattern.permute.xlu0 5
    %424 = vperm.xlu0 %423, %v44
    %v425 = vpop.permute.xlu0 %424
    %v427 = vadd.f32 %v425, %v422
    %v428 = vxor.u32 %v427, 2147483648
    %v429 = vmul.f32 %v428, 1.442695
    %v430 = vpow.pop %v429
    %v431 = vadd.f32 %v430, 1.0
    %v432 = vrcp.pop %v431
    %v433 = vmul.f32 1.0, %v432
    %v434 = vmul.f32 %v33, %v386
    %435 = vset.pattern.permute.xlu0 5
    %436 = vperm.xlu0 %435, %v50
    %v437 = vpop.permute.xlu0 %436
    %v439 = vadd.f32 %v437, %v434
    %v440 = vxor.u32 %v439, 2147483648
    %v441 = vmul.f32 %v440, 1.442695
    %v442 = vpow.pop %v441
    %v443 = vadd.f32 %v442, 1.0
    %v444 = vrcp.pop %v443
    %v445 = vmul.f32 1.0, %v444
    %v446 = vmul.f32 %v445, %v386
    %v447 = vmul.f32 %v35, %v446
    %448 = vset.pattern.permute.xlu0 5
    %449 = vperm.xlu0 %448, %v56
    %v450 = vpop.permute.xlu0 %449
    %v452 = vadd.f32 %v450, %v447
    %v453 = vtanh.pop %v452
    %v454 = vsub.f32 %v386, %v453
    %v455 = vmul.f32 %v433, %v454
    %v456 = vadd.f32 %v453, %v455
    %v457 = vmul.f32 %v37, %v456
    %458 = vset.pattern.permute.xlu0 5
    %459 = vperm.xlu0 %458, %v62
    %v460 = vpop.permute.xlu0 %459
    %v462 = vadd.f32 %v460, %v457
    %v463 = vadd.f32 %v462, %v397
    %v464 = vsel %vm112, %v463, -inf
    %465 = vmax.xlane.f32.xlu0 %v464
    %v466 = vpop.xlane.xlu0 %465
    %v467 = vsub.f32 %v463, %v466
    %v468 = vmul.f32 %v467, 1.442695
    %v469 = vpow.pop %v468
    %v470 = vmul.f32 %v456, %v469
    %v472 = vrot.slane %v470, 6
    %v474 = vsel %vm123, %v469, %v472
    %v475 = vsel %vm125, %v474, 0.0
    %476 = vadd.xlane.f32.xlu0 %v475
    %v477 = vpop.xlane.xlu0 %476
    %v479 = vrot.slane %v477, 6
    %v481 = vrcp.pop %v479
    %v482 = vmul.f32 %v477, %v481
    %vm483 = vcmp.eq.s32.totalorder %v65, 5
    %485 = vset.pattern.permute.xlu0 0
    %486 = vperm.xlu0 %485, %v482
    %v487 = vpop.permute.xlu0 %486
    %v489 = vsel %vm483, %v487, %v419
    %s490 = scalar_lea.vmem %s4, 10
    %491 = vst.msk [vmem:[%s490] sm:$0x3] %vm112, %v456
    %v492 = vmul.f32 %v31, %v456
    %493 = vset.pattern.permute.xlu0 6
    %494 = vperm.xlu0 %493, %v44
    %v495 = vpop.permute.xlu0 %494
    %v497 = vadd.f32 %v495, %v492
    %v498 = vxor.u32 %v497, 2147483648
    %v499 = vmul.f32 %v498, 1.442695
    %v500 = vpow.pop %v499
    %v501 = vadd.f32 %v500, 1.0
    %v502 = vrcp.pop %v501
    %v503 = vmul.f32 1.0, %v502
    %v504 = vmul.f32 %v33, %v456
    %505 = vset.pattern.permute.xlu0 6
    %506 = vperm.xlu0 %505, %v50
    %v507 = vpop.permute.xlu0 %506
    %v509 = vadd.f32 %v507, %v504
    %v510 = vxor.u32 %v509, 2147483648
    %v511 = vmul.f32 %v510, 1.442695
    %v512 = vpow.pop %v511
    %v513 = vadd.f32 %v512, 1.0
    %v514 = vrcp.pop %v513
    %v515 = vmul.f32 1.0, %v514
    %v516 = vmul.f32 %v515, %v456
    %v517 = vmul.f32 %v35, %v516
    %518 = vset.pattern.permute.xlu0 6
    %519 = vperm.xlu0 %518, %v56
    %v520 = vpop.permute.xlu0 %519
    %v522 = vadd.f32 %v520, %v517
    %v523 = vtanh.pop %v522
    %v524 = vsub.f32 %v456, %v523
    %v525 = vmul.f32 %v503, %v524
    %v526 = vadd.f32 %v523, %v525
    %v527 = vmul.f32 %v37, %v526
    %528 = vset.pattern.permute.xlu0 6
    %529 = vperm.xlu0 %528, %v62
    %v530 = vpop.permute.xlu0 %529
    %v532 = vadd.f32 %v530, %v527
    %v533 = vadd.f32 %v532, %v467
    %v534 = vsel %vm112, %v533, -inf
    %535 = vmax.xlane.f32.xlu0 %v534
    %v536 = vpop.xlane.xlu0 %535
    %v537 = vsub.f32 %v533, %v536
    %v538 = vmul.f32 %v537, 1.442695
    %v539 = vpow.pop %v538
    %v540 = vmul.f32 %v526, %v539
    %v542 = vrot.slane %v540, 6
    %v544 = vsel %vm123, %v539, %v542
    %v545 = vsel %vm125, %v544, 0.0
    %546 = vadd.xlane.f32.xlu0 %v545
    %v547 = vpop.xlane.xlu0 %546
    %v549 = vrot.slane %v547, 6
    %v551 = vrcp.pop %v549
    %v552 = vmul.f32 %v547, %v551
    %vm553 = vcmp.eq.s32.totalorder %v65, 6
    %555 = vset.pattern.permute.xlu0 0
    %556 = vperm.xlu0 %555, %v552
    %v557 = vpop.permute.xlu0 %556
    %v559 = vsel %vm553, %v557, %v489
    %s560 = scalar_lea.vmem %s4, 12
    %561 = vst.msk [vmem:[%s560] sm:$0x3] %vm112, %v526
    %v562 = vmul.f32 %v31, %v526
    %563 = vset.pattern.permute.xlu0 7
    %564 = vperm.xlu0 %563, %v44
    %v565 = vpop.permute.xlu0 %564
    %v567 = vadd.f32 %v565, %v562
    %v568 = vxor.u32 %v567, 2147483648
    %v569 = vmul.f32 %v568, 1.442695
    %v570 = vpow.pop %v569
    %v571 = vadd.f32 %v570, 1.0
    %v572 = vrcp.pop %v571
    %v573 = vmul.f32 1.0, %v572
    %v574 = vmul.f32 %v33, %v526
    %575 = vset.pattern.permute.xlu0 7
    %576 = vperm.xlu0 %575, %v50
    %v577 = vpop.permute.xlu0 %576
    %v579 = vadd.f32 %v577, %v574
    %v580 = vxor.u32 %v579, 2147483648
    %v581 = vmul.f32 %v580, 1.442695
    %v582 = vpow.pop %v581
    %v583 = vadd.f32 %v582, 1.0
    %v584 = vrcp.pop %v583
    %v585 = vmul.f32 1.0, %v584
    %v586 = vmul.f32 %v585, %v526
    %v587 = vmul.f32 %v35, %v586
    %588 = vset.pattern.permute.xlu0 7
    %589 = vperm.xlu0 %588, %v56
    %v590 = vpop.permute.xlu0 %589
    %v592 = vadd.f32 %v590, %v587
    %v593 = vtanh.pop %v592
    %v594 = vsub.f32 %v526, %v593
    %v595 = vmul.f32 %v573, %v594
    %v596 = vadd.f32 %v593, %v595
    %v597 = vmul.f32 %v37, %v596
    %598 = vset.pattern.permute.xlu0 7
    %599 = vperm.xlu0 %598, %v62
    %v600 = vpop.permute.xlu0 %599
    %v602 = vadd.f32 %v600, %v597
    %v603 = vadd.f32 %v602, %v537
    %v604 = vsel %vm112, %v603, -inf
    %605 = vmax.xlane.f32.xlu0 %v604
    %v606 = vpop.xlane.xlu0 %605
    %v607 = vsub.f32 %v603, %v606
    %v608 = vmul.f32 %v607, 1.442695
    %v609 = vpow.pop %v608
    %v610 = vmul.f32 %v596, %v609
    %v612 = vrot.slane %v610, 6
    %v614 = vsel %vm123, %v609, %v612
    %v615 = vsel %vm125, %v614, 0.0
    %616 = vadd.xlane.f32.xlu0 %v615
    %v617 = vpop.xlane.xlu0 %616
    %v619 = vrot.slane %v617, 6
    %v621 = vrcp.pop %v619
    %v622 = vmul.f32 %v617, %v621
    %vm623 = vcmp.eq.s32.totalorder %v65, 7
    %625 = vset.pattern.permute.xlu0 0
    %626 = vperm.xlu0 %625, %v622
    %v627 = vpop.permute.xlu0 %626
    %v629 = vsel %vm623, %v627, %v559
    %s630 = scalar_lea.vmem %s4, 14
    %631 = vst.msk [vmem:[%s630] sm:$0x3] %vm112, %v596
    %vm632 = vcmask 60418
    %633 = vst.msk [vmem:[#allocation5 - $0x2] sm:$0xc] %vm632, %v629
    // Predicated region
    $region18: #{harvey_svpf_forward.1} parent=1 // pred_check
      _
    $region19: #{harvey_svpf_forward.1} parent=1 // pred_check_branch
      %635 = sbr.rel (0) target = $region21
    $region20: #{harvey_svpf_forward.1} parent=1 // pred_region
      %s637 = ssub.s32 32, 32
      %638 = vsyncadd [#allocation3], %s637
      %s640 = sshll.u32 [#allocation5], 4
      %s641 = int_to_ptr.vmem [resolvable:$true] %s640
      %643 = dma.vmem_to_hbm [thread:$0]  %s641, 32, %s3, [#allocation3]
    $region21: #{harvey_svpf_forward.1} parent=1 // pred_fallthru
      _
    // Predicated region
    $region22: #{harvey_svpf_forward.1} parent=1 // pred_check
      _
    $region23: #{harvey_svpf_forward.1} parent=1 // pred_check_branch
      %645 = sbr.rel (0) target = $region25
    $region24: #{harvey_svpf_forward.1} parent=1 // pred_region
      _
    $region25: #{harvey_svpf_forward.1} parent=1 // pred_fallthru
      _
    // Predicated region
    $region26: #{harvey_svpf_forward.1} parent=1 // pred_check
      _
    $region27: #{harvey_svpf_forward.1} parent=1 // pred_check_branch
      %647 = sbr.rel (0) target = $region29
    $region28: #{harvey_svpf_forward.1} parent=1 // pred_region
      %648 = dma.done [#allocation3], 32
    $region29: #{harvey_svpf_forward.1} parent=1 // pred_fallthru
      _
    // Predicated region
    $region30: #{harvey_svpf_forward.1} parent=1 // pred_check
      _
    $region31: #{harvey_svpf_forward.1} parent=1 // pred_check_branch
      %650 = sbr.rel (0) target = $region33
    $region32: #{harvey_svpf_forward.1} parent=1 // pred_region
      _
    $region33: #{harvey_svpf_forward.1} parent=1 // pred_fallthru
      _
    %651 = vsyncpa [#allocation3], 1
    %652 = vsyncpa [#allocation4], 1

</llo_original>
